<compile_context>
chip_gen: v7x
topology: tpu7x:2x2x1
jax: 0.10.0
libtpu: 0.0.40
codegen_flags: <defaults>
</compile_context>

<pallas_src>
import functools

import numpy as np
import jax
import jax.numpy as jnp
from jax.experimental import pallas as pl
from jax.experimental.pallas import tpu as pltpu  # noqa: F401  (TPU backend)

_LANES = 128


def _threshold_kernel(bits_ref, o_ref, *, threshold):
    """o = (uniform_bits > floor(d * 2^32)) as int8, purely integer-domain."""
    o_ref[...] = (bits_ref[...] > jnp.uint32(threshold)).astype(jnp.int8)


def model_forward(input_tensor, d=0.5, seed=0):
    """Equivalent of Model(d).forward(input_tensor) -> bool tensor."""
    shape = input_tensor.shape
    n = int(np.prod(shape))

    # Lane-dense 2D layout padded to the (8, 128) vreg tiling.
    rows = -(-n // _LANES)            # ceil-div
    rows = -(-rows // 8) * 8          # pad sublanes to a multiple of 8

    # Single block for small shapes; 512-row lane-dense blocks for big ones
    # (512*128 int8 = 64 KiB per output buffer -> tiny even on v7x VMEM).
    block_rows = rows if rows <= 512 else 512
    rows = -(-rows // block_rows) * block_rows
    grid = (rows // block_rows,)

    # Uniform random bits (distributionally equivalent to torch.rand_like;
    # bitwise parity with PyTorch's RNG stream is impossible anyway).
    key = jax.random.PRNGKey(seed)
    bits = jax.random.bits(key, (rows, _LANES), dtype=jnp.uint32)

    # u > d  with u = bits / 2^32  <=>  bits > floor(d * 2^32)
    threshold = min(max(int(d * (1 << 32)), 0), (1 << 32) - 1)

    out_i8 = pl.pallas_call(
        functools.partial(_threshold_kernel, threshold=threshold),
        out_shape=jax.ShapeDtypeStruct((rows, _LANES), jnp.int8),
        grid=grid,
        in_specs=[pl.BlockSpec((block_rows, _LANES), lambda i: (i, 0))],
        out_specs=pl.BlockSpec((block_rows, _LANES), lambda i: (i, 0)),
    )(bits)

    if rows * _LANES == n:
        # Exactly-padded case (e.g. 2*4*16*16 = 2048 = 16*128): no slice op.
        return out_i8.astype(jnp.bool_).reshape(shape)
    return out_i8.reshape(-1)[:n].astype(jnp.bool_).reshape(shape)


if __name__ == "__main__":
    key = jax.random.PRNGKey(0)
    # Small NCHW conv-style input consistent with the module.
    x = jax.random.normal(key, (2, 4, 16, 16), dtype=jnp.float32)

    out = model_forward(x, d=0.5, seed=0)
    out = jax.block_until_ready(out)

    assert out.shape == x.shape, (out.shape, x.shape)
    assert out.dtype == jnp.bool_, out.dtype
    # Sanity: with d=0.5 roughly half the elements should be True.
    frac_true = float(jnp.mean(out.astype(jnp.float32)))
    assert 0.2 < frac_true < 0.8, frac_true

    print("KERNEL_OK")
</pallas_src>

<mosaic_0001>
module attributes {stable_mosaic.version = 11 : i64} {
  func.func @_threshold_kernel(%arg0: i32, %arg1: memref<16x128xi32, #tpu.memory_space<vmem>>, %arg2: memref<16x128xi8, #tpu.memory_space<vmem>>) attributes {dimension_semantics = [#tpu.dimension_semantics<arbitrary>], iteration_bounds = array<i64: 1>, scalar_prefetch = 0 : i64, scratch_operands = 0 : i64, tpu.core_type = #tpu.core_type<tc>, window_params = [{transform_indices = @transform_0, window_bounds = array<i64: 16, 128>}, {transform_indices = @transform_1, window_bounds = array<i64: 16, 128>}]} {
    %c0 = arith.constant 0 : index
    %c0_0 = arith.constant 0 : index
    %0 = vector.load %arg1[%c0, %c0_0] : memref<16x128xi32, #tpu.memory_space<vmem>>, vector<16x128xi32>
    %c-2147483648_i32 = arith.constant -2147483648 : i32
    %1 = vector.broadcast %c-2147483648_i32 : i32 to vector<16x128xi32>
    %2 = arith.cmpi ugt, %0, %1 : vector<16x128xi32>
    %3 = arith.extui %2 : vector<16x128xi1> to vector<16x128xi8>
    %c0_1 = arith.constant 0 : index
    %c0_2 = arith.constant 0 : index
    %4 = vector.load %arg2[%c0_1, %c0_2] : memref<16x128xi8, #tpu.memory_space<vmem>>, vector<16x128xi8>
    tpu.vector_store %arg2[%c0_1, %c0_2], %3 {strides = array<i32>} : memref<16x128xi8, #tpu.memory_space<vmem>>, vector<16x128xi8>,
    return
  }
  func.func @transform_0(%arg0: i32) -> (i32, i32) {
    %c0_i32 = arith.constant 0 : i32
    %c0_i32_0 = arith.constant 0 : i32
    return %arg0, %c0_i32 : i32, i32
  }
  func.func @transform_1(%arg0: i32) -> (i32, i32) {
    %c0_i32 = arith.constant 0 : i32
    %c0_i32_0 = arith.constant 0 : i32
    return %arg0, %c0_i32 : i32, i32
  }
}

</mosaic_0001>

<llo_original>
// kernel: tpu_custom_call.1
$region0: #{tpu_custom_call.1}
  #allocation0 [shape = 'u32[]', space=smem, size = 0x4, offset = 0x4, fixed_abs, tag = 'smem constant byte address 0x4 - core index']
  #allocation1 [shape = 'u32[144,128]{1,0:T(1,128)}', space=vmem, size = 0x12000, scoped, tag = 'internal scratch']
  %s0 = inlined_call_operand.hbm [shape: u32[16,128], index: 0, kind: input, shape index: {}]
  %s1 = inlined_call_operand.hbm [shape: s8[16,128], index: 1, kind: output, shape index: {}]
  %s2 = sld [smem:[#allocation0]]
  $region18: #{tpu_custom_call.1} parent=0
    _
  %s4 = ssub.s32 1, %s2
  %s5 = scalar_select 0, %s4, %s2
  $region1: #{tpu_custom_call.1} parent=0
    #allocation2 [shape = 'u8[8192]{0}', space=vmem, size = 0x2000, scoped, tag = 'input window, operand 0, single buffered']
    #allocation3 [shape = 's32[1]{0}', space=sflag, size = 0x4, scoped, tag = 'scoped memory for tpu_custom_call.1']
    #allocation4 [shape = 's32[1]{0}', space=sflag, size = 0x4, scoped, tag = 'scoped memory for tpu_custom_call.1']
    #allocation5 [shape = 'u8[2048]{0}', space=vmem, size = 0x800, scoped, tag = 'output window, operand 0, single buffered']
    %6 = vsyncpa [#allocation3], 0
    %7 = vsyncpa [#allocation4], 0
    // Predicated region
    $region2: #{tpu_custom_call.1} parent=1 // pred_check
      _
    $region3: #{tpu_custom_call.1} parent=1 // pred_check_branch
      %9 = sbr.rel (0) target = $region5
    $region4: #{tpu_custom_call.1} parent=1 // pred_region
      %s11 = ssub.s32 256, 256
      %12 = vsyncadd [#allocation3], %s11
      %s13 = sshll.u32 [#allocation2], 4
      %s14 = int_to_ptr.vmem [resolvable:$true] %s13
      %19 = dma.hbm_to_vmem [thread:$0]  %s0, 256, %s14, [#allocation3], 128, 128, 8
    $region5: #{tpu_custom_call.1} parent=1 // pred_fallthru
      _
    // Predicated region
    $region6: #{tpu_custom_call.1} parent=1 // pred_check
      _
    $region7: #{tpu_custom_call.1} parent=1 // pred_check_branch
      %21 = sbr.rel (0) target = $region9
    $region8: #{tpu_custom_call.1} parent=1 // pred_region
      %22 = dma.done [#allocation3], 256
    $region9: #{tpu_custom_call.1} parent=1 // pred_fallthru
      _
    %v25 = vld [vmem:[#allocation2] sm:$0xff]
    %v26 = vld [vmem:[#allocation2 + $0x8] sm:$0xff]
    %vm27 = vcmp.gt.u32.totalorder %v25, 2147483648
    %vm28 = vcmp.gt.u32.totalorder %v26, 2147483648
    %vm29 = vmpackc.low %vm28, %vm27
    %vm30 = vmpackc.even %vm29, %vm29
    %v31 = vsel %vm30, 16843009, 0
    %v32 = vunpack.c.0.s8 %v31
    %v33 = vunpack.c.1.s8 %v31
    %v34 = vpack.c.b16 %v32, %v32
    %v35 = vpack.c.b8 %v34, %v34
    %v36 = vpack.c.b16 %v33, %v33
    %v37 = vpack.c.b8 %v36, %v36
    %38 = vst [vmem:[#allocation5] sm:$0x3] %v35
    %39 = vst [vmem:[#allocation5 + $0x2] sm:$0x3] %v37
    // Predicated region
    $region10: #{tpu_custom_call.1} parent=1 // pred_check
      _
    $region11: #{tpu_custom_call.1} parent=1 // pred_check_branch
      %41 = sbr.rel (0) target = $region13
    $region12: #{tpu_custom_call.1} parent=1 // pred_region
      %s43 = ssub.s32 64, 64
      %44 = vsyncadd [#allocation4], %s43
      %s45 = sshll.u32 [#allocation5], 4
      %s46 = int_to_ptr.vmem [resolvable:$true] %s45
      %51 = dma.vmem_to_hbm [thread:$0]  %s46, 64, %s1, [#allocation4], 32, 32, 2
    $region13: #{tpu_custom_call.1} parent=1 // pred_fallthru
      _
    // Predicated region
    $region14: #{tpu_custom_call.1} parent=1 // pred_check
      _
    $region15: #{tpu_custom_call.1} parent=1 // pred_check_branch
      %53 = sbr.rel (0) target = $region17
    $region16: #{tpu_custom_call.1} parent=1 // pred_region
      %54 = dma.done [#allocation4], 64
    $region17: #{tpu_custom_call.1} parent=1 // pred_fallthru
      _
    %55 = vsyncpa [#allocation3], 1
    %56 = vsyncpa [#allocation4], 1

</llo_original>
